<compile_context>
chip_gen: v6e
topology: v6e:2x2x1
jax: 0.10.0
libtpu: 0.0.40
codegen_flags: <defaults>
</compile_context>

<pallas_src>
import jax
import jax.numpy as jnp
from jax import lax
from jax.experimental import pallas as pl
from jax.experimental.pallas import tpu as pltpu


def _round_up(n, m):
    return ((n + m - 1) // m) * m


def _mlp_kernel(x_ref,
                w1_ref, b1_ref,
                w2_ref, b2_ref,
                w3_ref, b3_ref,
                w4_ref, b4_ref,
                o_ref):
    """Fused MLP forward for one batch tile, in transposed (hidden, tm) layout.

    x_ref : (tm, F)    batch tile (batch on sublanes on input)
    w1    : (16, F)    PyTorch (out, in) layout -> W1 . x^T on the MXU
    w2    : (32, 16)
    w3    : (16, 32)
    w4    : (16, 1)    column vector for the VPU multiply + reduce final layer
    bK    : (outK, 1)  column biases, broadcast along the lane (batch) axis
    o_ref : (1, tm)    lane-dense output row
    """
    x = x_ref[...]                                            # (tm, F)

    # layer_1 + ReLU: (16, tm) = W1 (16,F) . x^T   (transpose-rhs MXU matmul)
    h = lax.dot_general(w1_ref[...], x, (((1,), (1,)), ((), ())),
                        preferred_element_type=jnp.float32)
    h = jnp.maximum(h + b1_ref[...], 0.0)                     # (16, tm)

    # layer_2 + ReLU: (32, tm) = W2 (32,16) @ h
    h = jnp.dot(w2_ref[...], h, preferred_element_type=jnp.float32)
    h = jnp.maximum(h + b2_ref[...], 0.0)                     # (32, tm)

    # layer_3 + ReLU: (16, tm) = W3 (16,32) @ h
    h = jnp.dot(w3_ref[...], h, preferred_element_type=jnp.float32)
    h = jnp.maximum(h + b3_ref[...], 0.0)                     # (16, tm)

    # layer_out: (1, tm) via VPU multiply + sublane reduce (avoids an M=1 matmul)
    y = jnp.sum(w4_ref[...] * h, axis=0, keepdims=True) + b4_ref[...]
    o_ref[...] = y.astype(o_ref.dtype)                        # lane-dense store


def multiple_regression_forward(x, params, *, tm=512):
    """Forward pass. x: (B, F) float32; params in PyTorch layout (see init)."""
    B, F = x.shape
    x = x.astype(jnp.float32)

    # Lane-dense batch tile: multiple of 128, no larger than the padded batch.
    tm = max(128, _round_up(min(tm, _round_up(B, 128)), 128))
    B_pad = _round_up(B, tm)
    if B_pad != B:
        x = jnp.pad(x, ((0, B_pad - B), (0, 0)))
    n_tiles = B_pad // tm
    # NOTE(v7x): the "parallel" grid axis is sharded across the two
    # TensorCores whenever n_tiles >= 2 (realistic batches at tm=512).

    # Kernel-side parameter layouts: layers 1-3 keep PyTorch (out, in) weights,
    # the final weight becomes a (16, 1) column, biases become (out, 1) columns.
    w1 = params["w1"]
    w2 = params["w2"]
    w3 = params["w3"]
    w4 = jnp.reshape(params["w4"], (-1, 1))
    b1 = jnp.reshape(params["b1"], (-1, 1))
    b2 = jnp.reshape(params["b2"], (-1, 1))
    b3 = jnp.reshape(params["b3"], (-1, 1))
    b4 = jnp.reshape(params["b4"], (-1, 1))

    def full(arr):
        # whole-array block, same (tiny) tile for every grid step
        return pl.BlockSpec(arr.shape, lambda i: (0, 0))

    out = pl.pallas_call(
        _mlp_kernel,
        out_shape=jax.ShapeDtypeStruct((1, B_pad), jnp.float32),
        grid_spec=pltpu.PrefetchScalarGridSpec(
            num_scalar_prefetch=0,
            grid=(n_tiles,),
            in_specs=[
                pl.BlockSpec((tm, F), lambda i: (i, 0)),      # x tile
                full(w1), full(b1),
                full(w2), full(b2),
                full(w3), full(b3),
                full(w4), full(b4),
            ],
            out_specs=pl.BlockSpec((1, tm), lambda i: (0, i)),  # lane-dense row
        ),
        compiler_params=pltpu.CompilerParams(
            dimension_semantics=("parallel",)),
    )(x, w1, b1, w2, b2, w3, b3, w4, b4)

    return out[0, :B].reshape(B, 1)


def init_params(num_features, key):
    """nn.Linear-style init; weights (out, in), biases (out,), like PyTorch."""
    dims = [(num_features, 16), (16, 32), (32, 16), (16, 1)]
    params = {}
    for idx, (din, dout) in enumerate(dims, start=1):
        key, kw, kb = jax.random.split(key, 3)
        bound = 1.0 / jnp.sqrt(jnp.float32(din))
        params[f"w{idx}"] = jax.random.uniform(
            kw, (dout, din), jnp.float32, minval=-bound, maxval=bound)
        params[f"b{idx}"] = jax.random.uniform(
            kb, (dout,), jnp.float32, minval=-bound, maxval=bound)
    return params


def reference_forward(x, params):
    """Plain-JAX reference mirroring the PyTorch forward."""
    h = jnp.maximum(x @ params["w1"].T + params["b1"], 0.0)
    h = jnp.maximum(h @ params["w2"].T + params["b2"], 0.0)
    h = jnp.maximum(h @ params["w3"].T + params["b3"], 0.0)
    return h @ params["w4"].T + params["b4"]


if __name__ == "__main__":
    key = jax.random.PRNGKey(0)
    num_features = 32
    batch = 8

    key, kx = jax.random.split(key)
    x = jax.random.normal(kx, (batch, num_features), jnp.float32)
    params = init_params(num_features, key)

    out = multiple_regression_forward(x, params)
    out = jax.block_until_ready(out)

    ref = reference_forward(x, params)
    assert out.shape == (batch, 1)
    assert jnp.allclose(out, ref, atol=1e-5, rtol=1e-5), "mismatch vs. reference"

    print("KERNEL_OK")
</pallas_src>

<mosaic_0001>
module attributes {stable_mosaic.version = 11 : i64} {
  func.func @_mlp_kernel(%arg0: i32, %arg1: memref<128x32xf32, #tpu.memory_space<vmem>>, %arg2: memref<16x32xf32, #tpu.memory_space<vmem>>, %arg3: memref<16x1xf32, #tpu.memory_space<vmem>>, %arg4: memref<32x16xf32, #tpu.memory_space<vmem>>, %arg5: memref<32x1xf32, #tpu.memory_space<vmem>>, %arg6: memref<16x32xf32, #tpu.memory_space<vmem>>, %arg7: memref<16x1xf32, #tpu.memory_space<vmem>>, %arg8: memref<16x1xf32, #tpu.memory_space<vmem>>, %arg9: memref<1x1xf32, #tpu.memory_space<vmem>>, %arg10: memref<1x128xf32, #tpu.memory_space<vmem>>) attributes {dimension_semantics = [#tpu.dimension_semantics<parallel>], iteration_bounds = array<i64: 1>, scalar_prefetch = 0 : i64, scratch_operands = 0 : i64, tpu.core_type = #tpu.core_type<tc>, window_params = [{transform_indices = @transform_0, window_bounds = array<i64: 128, 32>}, {pipeline_mode = #tpu.pipeline_mode<synchronous>, transform_indices = @transform_1, window_bounds = array<i64: 16, 32>}, {pipeline_mode = #tpu.pipeline_mode<synchronous>, transform_indices = @transform_2, window_bounds = array<i64: 16, 1>}, {pipeline_mode = #tpu.pipeline_mode<synchronous>, transform_indices = @transform_3, window_bounds = array<i64: 32, 16>}, {pipeline_mode = #tpu.pipeline_mode<synchronous>, transform_indices = @transform_4, window_bounds = array<i64: 32, 1>}, {pipeline_mode = #tpu.pipeline_mode<synchronous>, transform_indices = @transform_5, window_bounds = array<i64: 16, 32>}, {pipeline_mode = #tpu.pipeline_mode<synchronous>, transform_indices = @transform_6, window_bounds = array<i64: 16, 1>}, {pipeline_mode = #tpu.pipeline_mode<synchronous>, transform_indices = @transform_7, window_bounds = array<i64: 16, 1>}, {pipeline_mode = #tpu.pipeline_mode<synchronous>, transform_indices = @transform_8, window_bounds = array<i64: 1, 1>}, {transform_indices = @transform_9, window_bounds = array<i64: 1, 128>}]} {
    %c0 = arith.constant 0 : index
    %c0_0 = arith.constant 0 : index
    %0 = vector.load %arg1[%c0, %c0_0] : memref<128x32xf32, #tpu.memory_space<vmem>>, vector<128x32xf32>
    %c0_1 = arith.constant 0 : index
    %c0_2 = arith.constant 0 : index
    %1 = vector.load %arg2[%c0_1, %c0_2] : memref<16x32xf32, #tpu.memory_space<vmem>>, vector<16x32xf32>
    %cst = arith.constant dense<0.000000e+00> : vector<16x128xf32>
    %2 = tpu.matmul %1, %0, %cst {dimension_numbers = #tpu.dot_dimension_numbers<[1], [1], [0], [0], [0, 0, 1, 0], [], []>} : vector<16x32xf32>, vector<128x32xf32>, vector<16x128xf32> -> vector<16x128xf32>
    %c0_3 = arith.constant 0 : index
    %c0_4 = arith.constant 0 : index
    %3 = vector.load %arg3[%c0_3, %c0_4] : memref<16x1xf32, #tpu.memory_space<vmem>>, vector<16x1xf32>
    %4 = vector.broadcast %3 : vector<16x1xf32> to vector<16x128xf32>
    %5 = arith.addf %2, %4 : vector<16x128xf32>
    %cst_5 = arith.constant 0.000000e+00 : f32
    %6 = vector.broadcast %cst_5 : f32 to vector<16x128xf32>
    %7 = arith.maximumf %5, %6 : vector<16x128xf32>
    %c0_6 = arith.constant 0 : index
    %c0_7 = arith.constant 0 : index
    %8 = vector.load %arg4[%c0_6, %c0_7] : memref<32x16xf32, #tpu.memory_space<vmem>>, vector<32x16xf32>
    %cst_8 = arith.constant dense<0.000000e+00> : vector<32x128xf32>
    %9 = tpu.matmul %8, %7, %cst_8 {dimension_numbers = #tpu.dot_dimension_numbers<[1], [0], [0], [1], [0, 0, 1, 1], [], []>} : vector<32x16xf32>, vector<16x128xf32>, vector<32x128xf32> -> vector<32x128xf32>
    %c0_9 = arith.constant 0 : index
    %c0_10 = arith.constant 0 : index
    %10 = vector.load %arg5[%c0_9, %c0_10] : memref<32x1xf32, #tpu.memory_space<vmem>>, vector<32x1xf32>
    %11 = vector.broadcast %10 : vector<32x1xf32> to vector<32x128xf32>
    %12 = arith.addf %9, %11 : vector<32x128xf32>
    %cst_11 = arith.constant 0.000000e+00 : f32
    %13 = vector.broadcast %cst_11 : f32 to vector<32x128xf32>
    %14 = arith.maximumf %12, %13 : vector<32x128xf32>
    %c0_12 = arith.constant 0 : index
    %c0_13 = arith.constant 0 : index
    %15 = vector.load %arg6[%c0_12, %c0_13] : memref<16x32xf32, #tpu.memory_space<vmem>>, vector<16x32xf32>
    %cst_14 = arith.constant dense<0.000000e+00> : vector<16x128xf32>
    %16 = tpu.matmul %15, %14, %cst_14 {dimension_numbers = #tpu.dot_dimension_numbers<[1], [0], [0], [1], [0, 0, 1, 1], [], []>} : vector<16x32xf32>, vector<32x128xf32>, vector<16x128xf32> -> vector<16x128xf32>
    %c0_15 = arith.constant 0 : index
    %c0_16 = arith.constant 0 : index
    %17 = vector.load %arg7[%c0_15, %c0_16] : memref<16x1xf32, #tpu.memory_space<vmem>>, vector<16x1xf32>
    %18 = vector.broadcast %17 : vector<16x1xf32> to vector<16x128xf32>
    %19 = arith.addf %16, %18 : vector<16x128xf32>
    %cst_17 = arith.constant 0.000000e+00 : f32
    %20 = vector.broadcast %cst_17 : f32 to vector<16x128xf32>
    %21 = arith.maximumf %19, %20 : vector<16x128xf32>
    %c0_18 = arith.constant 0 : index
    %c0_19 = arith.constant 0 : index
    %22 = vector.load %arg8[%c0_18, %c0_19] : memref<16x1xf32, #tpu.memory_space<vmem>>, vector<16x1xf32>
    %23 = vector.broadcast %22 : vector<16x1xf32> to vector<16x128xf32>
    %24 = arith.mulf %23, %21 : vector<16x128xf32>
    %cst_20 = arith.constant dense<0.000000e+00> : vector<128xf32>
    %25 = vector.multi_reduction <add>, %24, %cst_20 [0] : vector<16x128xf32> to vector<128xf32>
    %26 = vector.shape_cast %25 : vector<128xf32> to vector<1x128xf32>
    %c0_21 = arith.constant 0 : index
    %c0_22 = arith.constant 0 : index
    %27 = vector.load %arg9[%c0_21, %c0_22] : memref<1x1xf32, #tpu.memory_space<vmem>>, vector<1x1xf32>
    %28 = vector.broadcast %27 : vector<1x1xf32> to vector<1x128xf32>
    %29 = arith.addf %26, %28 : vector<1x128xf32>
    %c0_23 = arith.constant 0 : index
    %c0_24 = arith.constant 0 : index
    %30 = vector.load %arg10[%c0_23, %c0_24] : memref<1x128xf32, #tpu.memory_space<vmem>>, vector<1x128xf32>
    tpu.vector_store %arg10[%c0_23, %c0_24], %29 {strides = array<i32>} : memref<1x128xf32, #tpu.memory_space<vmem>>, vector<1x128xf32>,
    return
  }
  func.func @transform_0(%arg0: i32) -> (i32, i32) {
    %c0_i32 = arith.constant 0 : i32
    %c0_i32_0 = arith.constant 0 : i32
    return %arg0, %c0_i32 : i32, i32
  }
  func.func @transform_1(%arg0: i32) -> (i32, i32) {
    %c0_i32 = arith.constant 0 : i32
    %c0_i32_0 = arith.constant 0 : i32
    %c0_i32_1 = arith.constant 0 : i32
    return %c0_i32, %c0_i32_0 : i32, i32
  }
  func.func @transform_2(%arg0: i32) -> (i32, i32) {
    %c0_i32 = arith.constant 0 : i32
    %c0_i32_0 = arith.constant 0 : i32
    %c0_i32_1 = arith.constant 0 : i32
    return %c0_i32, %c0_i32_0 : i32, i32
  }
  func.func @transform_3(%arg0: i32) -> (i32, i32) {
    %c0_i32 = arith.constant 0 : i32
    %c0_i32_0 = arith.constant 0 : i32
    %c0_i32_1 = arith.constant 0 : i32
    return %c0_i32, %c0_i32_0 : i32, i32
  }
  func.func @transform_4(%arg0: i32) -> (i32, i32) {
    %c0_i32 = arith.constant 0 : i32
    %c0_i32_0 = arith.constant 0 : i32
    %c0_i32_1 = arith.constant 0 : i32
    return %c0_i32, %c0_i32_0 : i32, i32
  }
  func.func @transform_5(%arg0: i32) -> (i32, i32) {
    %c0_i32 = arith.constant 0 : i32
    %c0_i32_0 = arith.constant 0 : i32
    %c0_i32_1 = arith.constant 0 : i32
    return %c0_i32, %c0_i32_0 : i32, i32
  }
  func.func @transform_6(%arg0: i32) -> (i32, i32) {
    %c0_i32 = arith.constant 0 : i32
    %c0_i32_0 = arith.constant 0 : i32
    %c0_i32_1 = arith.constant 0 : i32
    return %c0_i32, %c0_i32_0 : i32, i32
  }
  func.func @transform_7(%arg0: i32) -> (i32, i32) {
    %c0_i32 = arith.constant 0 : i32
    %c0_i32_0 = arith.constant 0 : i32
    %c0_i32_1 = arith.constant 0 : i32
    return %c0_i32, %c0_i32_0 : i32, i32
  }
  func.func @transform_8(%arg0: i32) -> (i32, i32) {
    %c0_i32 = arith.constant 0 : i32
    %c0_i32_0 = arith.constant 0 : i32
    %c0_i32_1 = arith.constant 0 : i32
    return %c0_i32, %c0_i32_0 : i32, i32
  }
  func.func @transform_9(%arg0: i32) -> (i32, i32) {
    %c0_i32 = arith.constant 0 : i32
    %c0_i32_0 = arith.constant 0 : i32
    return %c0_i32, %arg0 : i32, i32
  }
}

</mosaic_0001>

<llo_original>
// kernel: tpu_custom_call.1
$region0: #{tpu_custom_call.1}
  #allocation0 [shape = 'u32[]', space=smem, size = 0x4, offset = 0x4, fixed_abs, tag = 'smem constant byte address 0x4 - core index']
  #allocation1 [shape = 'u32[144,128]{1,0:T(1,128)}', space=vmem, size = 0x12000, scoped, tag = 'internal scratch']
  #allocation2 [shape = 'f32[1,1]{1,0:T(1,128)S(1)}', space=vmem, size = 0x200, scoped, tag = 'scoped memory for tpu_custom_call.1']
  %s0 = inlined_call_operand.vmem [shape: f32[128,32], index: 0, kind: input, shape index: {}]
  %s1 = inlined_call_operand.vmem [shape: f32[16,32], index: 1, kind: input, shape index: {}]
  %s2 = inlined_call_operand.vmem [shape: f32[16,1], index: 2, kind: input, shape index: {}]
  %s3 = inlined_call_operand.vmem [shape: f32[32,16], index: 3, kind: input, shape index: {}]
  %s4 = inlined_call_operand.vmem [shape: f32[32,1], index: 4, kind: input, shape index: {}]
  %s5 = inlined_call_operand.vmem [shape: f32[16,32], index: 5, kind: input, shape index: {}]
  %s6 = inlined_call_operand.vmem [shape: f32[16,1], index: 6, kind: input, shape index: {}]
  %s7 = inlined_call_operand.vmem [shape: f32[16,1], index: 7, kind: input, shape index: {}]
  %s8 = inlined_call_operand.<no memory space> [shape: f32[1,1], index: 8, kind: input, shape index: {}]
  %s9 = inlined_call_operand.hbm [shape: f32[1,128], index: 9, kind: output, shape index: {}]
  %s10 = sld [smem:[#allocation0]]
  $region46: #{tpu_custom_call.1} parent=0
    _
  %s12 = ssub.s32 1, %s10
  %s13 = scalar_select 0, %s12, %s10
  %v14 = vstv %s8
  %15 = vst [vmem:[#allocation2] sm:$0x1] %v14
  $region1: #{tpu_custom_call.1} parent=0
    #allocation3 [shape = 'u8[512]{0}', space=vmem, size = 0x400, scoped, tag = 'output window, operand 0, single buffered']
    #allocation4 [shape = 's32[1]{0}', space=sflag, size = 0x4, scoped, tag = 'scoped memory for tpu_custom_call.1']
    %16 = vsyncpa [#allocation4], 0
    // Predicated region
    $region2: #{tpu_custom_call.1} parent=1 // pred_check
      _
    $region3: #{tpu_custom_call.1} parent=1 // pred_check_branch
      %18 = sbr.rel (0) target = $region5
    $region4: #{tpu_custom_call.1} parent=1 // pred_region
      _
    $region5: #{tpu_custom_call.1} parent=1 // pred_fallthru
      _
    // Predicated region
    $region6: #{tpu_custom_call.1} parent=1 // pred_check
      _
    $region7: #{tpu_custom_call.1} parent=1 // pred_check_branch
      %20 = sbr.rel (0) target = $region9
    $region8: #{tpu_custom_call.1} parent=1 // pred_region
      _
    $region9: #{tpu_custom_call.1} parent=1 // pred_fallthru
      _
    // Predicated region
    $region10: #{tpu_custom_call.1} parent=1 // pred_check
      _
    $region11: #{tpu_custom_call.1} parent=1 // pred_check_branch
      %22 = sbr.rel (0) target = $region13
    $region12: #{tpu_custom_call.1} parent=1 // pred_region
      _
    $region13: #{tpu_custom_call.1} parent=1 // pred_fallthru
      _
    // Predicated region
    $region14: #{tpu_custom_call.1} parent=1 // pred_check
      _
    $region15: #{tpu_custom_call.1} parent=1 // pred_check_branch
      %24 = sbr.rel (0) target = $region17
    $region16: #{tpu_custom_call.1} parent=1 // pred_region
      _
    $region17: #{tpu_custom_call.1} parent=1 // pred_fallthru
      _
    // Predicated region
    $region18: #{tpu_custom_call.1} parent=1 // pred_check
      _
    $region19: #{tpu_custom_call.1} parent=1 // pred_check_branch
      %26 = sbr.rel (0) target = $region21
    $region20: #{tpu_custom_call.1} parent=1 // pred_region
      _
    $region21: #{tpu_custom_call.1} parent=1 // pred_fallthru
      _
    // Predicated region
    $region22: #{tpu_custom_call.1} parent=1 // pred_check
      _
    $region23: #{tpu_custom_call.1} parent=1 // pred_check_branch
      %28 = sbr.rel (0) target = $region25
    $region24: #{tpu_custom_call.1} parent=1 // pred_region
      _
    $region25: #{tpu_custom_call.1} parent=1 // pred_fallthru
      _
    // Predicated region
    $region26: #{tpu_custom_call.1} parent=1 // pred_check
      _
    $region27: #{tpu_custom_call.1} parent=1 // pred_check_branch
      %30 = sbr.rel (0) target = $region29
    $region28: #{tpu_custom_call.1} parent=1 // pred_region
      _
    $region29: #{tpu_custom_call.1} parent=1 // pred_fallthru
      _
    // Predicated region
    $region30: #{tpu_custom_call.1} parent=1 // pred_check
      _
    $region31: #{tpu_custom_call.1} parent=1 // pred_check_branch
      %32 = sbr.rel (0) target = $region33
    $region32: #{tpu_custom_call.1} parent=1 // pred_region
      _
    $region33: #{tpu_custom_call.1} parent=1 // pred_fallthru
      _
    // Predicated region
    $region34: #{tpu_custom_call.1} parent=1 // pred_check
      _
    $region35: #{tpu_custom_call.1} parent=1 // pred_check_branch
      %34 = sbr.rel (0) target = $region37
    $region36: #{tpu_custom_call.1} parent=1 // pred_region
      _
    $region37: #{tpu_custom_call.1} parent=1 // pred_fallthru
      _
    %v35 = vld [vmem:[%s0] sm:$0xff]
    %v36 = vld [vmem:[%s0 + $0x8] sm:$0xff]
    %v37 = vld [vmem:[%s0 + $0x10] sm:$0xff]
    %v38 = vld [vmem:[%s0 + $0x18] sm:$0xff]
    %v39 = vld [vmem:[%s0 + $0x20] sm:$0xff]
    %v40 = vld [vmem:[%s0 + $0x28] sm:$0xff]
    %v41 = vld [vmem:[%s0 + $0x30] sm:$0xff]
    %v42 = vld [vmem:[%s0 + $0x38] sm:$0xff]
    %v43 = vld [vmem:[%s0 + $0x40] sm:$0xff]
    %v44 = vld [vmem:[%s0 + $0x48] sm:$0xff]
    %v45 = vld [vmem:[%s0 + $0x50] sm:$0xff]
    %v46 = vld [vmem:[%s0 + $0x58] sm:$0xff]
    %v47 = vld [vmem:[%s0 + $0x60] sm:$0xff]
    %v48 = vld [vmem:[%s0 + $0x68] sm:$0xff]
    %v49 = vld [vmem:[%s0 + $0x70] sm:$0xff]
    %v50 = vld [vmem:[%s0 + $0x78] sm:$0xff]
    %v51 = vld [vmem:[%s1] sm:$0xff]
    %v52 = vld [vmem:[%s1 + $0x8] sm:$0xff]
    %v53 = vld [vmem:[%s2] sm:$0xff]
    %v54 = vld [vmem:[%s2 + $0x8] sm:$0xff]
    %56 = vset.pattern.permute.xlu0 0
    %57 = vperm.xlu0 %56, %v53
    %v58 = vpop.permute.xlu0 %57
    %61 = vset.pattern.permute.xlu0 0
    %62 = vperm.xlu0 %61, %v54
    %v63 = vpop.permute.xlu0 %62
    %vm65 = vcmask 261120
    %v67 = vsel %vm65, %v51, 0
    %v70 = vsel %vm65, %v52, 0
    %v73 = vsel %vm65, %v35, 0
    %v76 = vsel %vm65, %v36, 0
    %v79 = vsel %vm65, %v37, 0
    %v82 = vsel %vm65, %v38, 0
    %v85 = vsel %vm65, %v39, 0
    %v88 = vsel %vm65, %v40, 0
    %v91 = vsel %vm65, %v41, 0
    %v94 = vsel %vm65, %v42, 0
    %v97 = vsel %vm65, %v43, 0
    %v100 = vsel %vm65, %v44, 0
    %v103 = vsel %vm65, %v45, 0
    %v106 = vsel %vm65, %v46, 0
    %v109 = vsel %vm65, %v47, 0
    %v112 = vsel %vm65, %v48, 0
    %v115 = vsel %vm65, %v49, 0
    %v118 = vsel %vm65, %v50, 0
    %120 = vmatprep.subr.mxu0 0.0
    %121 = vmatpush1.xpose.msra.mxu0 %v118
    %122 = vmatprep.subr.mxu0 0.0
    %123 = vmatpush1.xpose.msra.mxu0 %v115
    %124 = vmatprep.subr.mxu0 0.0
    %125 = vmatpush1.xpose.msra.mxu0 %v112
    %126 = vmatprep.subr.mxu0 0.0
    %127 = vmatpush1.xpose.msra.mxu0 %v109
    %128 = vmatprep.subr.mxu0 0.0
    %129 = vmatpush1.xpose.msra.mxu0 %v106
    %130 = vmatprep.subr.mxu0 0.0
    %131 = vmatpush1.xpose.msra.mxu0 %v103
    %132 = vmatprep.subr.mxu0 0.0
    %133 = vmatpush1.xpose.msra.mxu0 %v100
    %134 = vmatprep.subr.mxu0 0.0
    %135 = vmatpush1.xpose.msra.mxu0 %v97
    %136 = vmatprep.subr.mxu0 0.0
    %137 = vmatpush1.xpose.msra.mxu0 %v94
    %138 = vmatprep.subr.mxu0 0.0
    %139 = vmatpush1.xpose.msra.mxu0 %v91
    %140 = vmatprep.subr.mxu0 0.0
    %141 = vmatpush1.xpose.msra.mxu0 %v88
    %142 = vmatprep.subr.mxu0 0.0
    %143 = vmatpush1.xpose.msra.mxu0 %v85
    %144 = vmatprep.subr.mxu0 0.0
    %145 = vmatpush1.xpose.msra.mxu0 %v82
    %146 = vmatprep.subr.mxu0 0.0
    %147 = vmatpush1.xpose.msra.mxu0 %v79
    %148 = vmatprep.subr.mxu0 0.0
    %149 = vmatpush1.xpose.msra.mxu0 %v76
    %150 = vmatprep.subr.mxu0 0.0
    %151 = vmatpush1.xpose.msra.mxu0 %v73
    %152 = vmatprep.subr.mxu0 0.0
    %153 = vmatpush2.xpose.msra.mxu0 0.0
    %154 = vmatprep.subr.mxu0 0.0
    %155 = vmatpush2.xpose.msra.mxu0 0.0
    %156 = vmatprep.subr.mxu0 0.0
    %157 = vmatpush2.xpose.msra.mxu0 0.0
    %158 = vmatprep.subr.mxu0 0.0
    %159 = vmatpush2.xpose.msra.mxu0 0.0
    %160 = vmatprep.subr.mxu0 0.0
    %161 = vmatpush2.xpose.msra.mxu0 0.0
    %162 = vmatprep.subr.mxu0 0.0
    %163 = vmatpush2.xpose.msra.mxu0 0.0
    %164 = vmatprep.subr.mxu0 0.0
    %165 = vmatpush2.xpose.msra.mxu0 0.0
    %166 = vmatprep.subr.mxu0 0.0
    %167 = vmatpush2.xpose.msra.mxu0 0.0
    %168 = vmatprep.subr.mxu0 0.0
    %169 = vmatpush2.xpose.msra.mxu0 0.0
    %170 = vmatprep.subr.mxu0 0.0
    %171 = vmatpush2.xpose.msra.mxu0 0.0
    %172 = vmatprep.subr.mxu0 0.0
    %173 = vmatpush2.xpose.msra.mxu0 0.0
    %174 = vmatprep.subr.mxu0 0.0
    %175 = vmatpush2.xpose.msra.mxu0 0.0
    %176 = vmatprep.subr.mxu0 0.0
    %177 = vmatpush2.xpose.msra.mxu0 0.0
    %178 = vmatprep.subr.mxu0 0.0
    %179 = vmatpush2.xpose.msra.mxu0 0.0
    %180 = vmatprep.subr.mxu0 0.0
    %181 = vmatpush2.xpose.msra.mxu0 0.0
    %182 = vmatprep.subr.mxu0 0.0
    %183 = vmatpush2.xpose.msra.mxu0 0.0
    %184 = vmatprep.mubr.f32.mxu0 0.0
    %185 = vmatmul.mubr.f32.gmra.mxu0 %v67
    %v186 = vpop.f32.mrf.mxu0
    %v187 = vadd.f32 %v58, %v186
    %v188 = vpop.f32.mrf.mxu0
    %189 = vmatprep.mubr.f32.mxu0 0.0
    %190 = vmatmul.mubr.f32.gmra.mxu0 %v70
    %v191 = vpop.f32.mrf.mxu0
    %v192 = vadd.f32 %v63, %v191
    %v193 = vpop.f32.mrf.mxu0
    %194 = vdwg.mxu0
    %v195 = vmax.f32 %v187, 0.0
    %v196 = vmax.f32 %v192, 0.0
    %v197 = vld [vmem:[%s3] sm:$0xff]
    %v198 = vld [vmem:[%s3 + $0x8] sm:$0xff]
    %v199 = vld [vmem:[%s3 + $0x10] sm:$0xff]
    %v200 = vld [vmem:[%s3 + $0x18] sm:$0xff]
    %v201 = vld [vmem:[%s4] sm:$0xff]
    %v202 = vld [vmem:[%s4 + $0x8] sm:$0xff]
    %v203 = vld [vmem:[%s4 + $0x10] sm:$0xff]
    %v204 = vld [vmem:[%s4 + $0x18] sm:$0xff]
    %206 = vset.pattern.permute.xlu0 0
    %207 = vperm.xlu0 %206, %v201
    %v208 = vpop.permute.xlu0 %207
    %211 = vset.pattern.permute.xlu0 0
    %212 = vperm.xlu0 %211, %v202
    %v213 = vpop.permute.xlu0 %212
    %216 = vset.pattern.permute.xlu0 0
    %217 = vperm.xlu0 %216, %v203
    %v218 = vpop.permute.xlu0 %217
    %221 = vset.pattern.permute.xlu0 0
    %222 = vperm.xlu0 %221, %v204
    %v223 = vpop.permute.xlu0 %222
    %vm225 = vcmask 130048
    %v227 = vsel %vm225, %v197, 0
    %v230 = vsel %vm225, %v198, 0
    %v233 = vsel %vm225, %v199, 0
    %v236 = vsel %vm225, %v200, 0
    %238 = vmatprep.subr.mxu0 0.0
    %239 = vmatpush1.msra.mxu0 0.0
    %240 = vmatprep.subr.mxu0 0.0
    %241 = vmatpush1.msra.mxu0 0.0
    %242 = vmatprep.subr.mxu0 0.0
    %243 = vmatpush1.msra.mxu0 0.0
    %244 = vmatprep.subr.mxu0 0.0
    %245 = vmatpush1.msra.mxu0 0.0
    %246 = vmatprep.subr.mxu0 0.0
    %247 = vmatpush1.msra.mxu0 0.0
    %248 = vmatprep.subr.mxu0 0.0
    %249 = vmatpush1.msra.mxu0 0.0
    %250 = vmatprep.subr.mxu0 0.0
    %251 = vmatpush1.msra.mxu0 0.0
    %252 = vmatprep.subr.mxu0 0.0
    %253 = vmatpush1.msra.mxu0 0.0
    %254 = vmatprep.subr.mxu0 0.0
    %255 = vmatpush1.msra.mxu0 0.0
    %256 = vmatprep.subr.mxu0 0.0
    %257 = vmatpush1.msra.mxu0 0.0
    %258 = vmatprep.subr.mxu0 0.0
    %259 = vmatpush1.msra.mxu0 0.0
    %260 = vmatprep.subr.mxu0 0.0
    %261 = vmatpush1.msra.mxu0 0.0
    %262 = vmatprep.subr.mxu0 0.0
    %263 = vmatpush1.msra.mxu0 0.0
    %264 = vmatprep.subr.mxu0 0.0
    %265 = vmatpush1.msra.mxu0 0.0
    %266 = vmatprep.subr.mxu0 0.0
    %267 = vmatpush1.msra.mxu0 %v196
    %268 = vmatprep.subr.mxu0 0.0
    %269 = vmatpush1.msra.mxu0 %v195
    %270 = vmatprep.subr.mxu0 0.0
    %271 = vmatpush2.msra.mxu0 0.0
    %272 = vmatprep.subr.mxu0 0.0
    %273 = vmatpush2.msra.mxu0 0.0
    %274 = vmatprep.subr.mxu0 0.0
    %275 = vmatpush2.msra.mxu0 0.0
    %276 = vmatprep.subr.mxu0 0.0
    %277 = vmatpush2.msra.mxu0 0.0
    %278 = vmatprep.subr.mxu0 0.0
    %279 = vmatpush2.msra.mxu0 0.0
    %280 = vmatprep.subr.mxu0 0.0
    %281 = vmatpush2.msra.mxu0 0.0
    %282 = vmatprep.subr.mxu0 0.0
    %283 = vmatpush2.msra.mxu0 0.0
    %284 = vmatprep.subr.mxu0 0.0
    %285 = vmatpush2.msra.mxu0 0.0
    %286 = vmatprep.subr.mxu0 0.0
    %287 = vmatpush2.msra.mxu0 0.0
    %288 = vmatprep.subr.mxu0 0.0
    %289 = vmatpush2.msra.mxu0 0.0
    %290 = vmatprep.subr.mxu0 0.0
    %291 = vmatpush2.msra.mxu0 0.0
    %292 = vmatprep.subr.mxu0 0.0
    %293 = vmatpush2.msra.mxu0 0.0
    %294 = vmatprep.subr.mxu0 0.0
    %295 = vmatpush2.msra.mxu0 0.0
    %296 = vmatprep.subr.mxu0 0.0
    %297 = vmatpush2.msra.mxu0 0.0
    %298 = vmatprep.subr.mxu0 0.0
    %299 = vmatpush2.msra.mxu0 0.0
    %300 = vmatprep.subr.mxu0 0.0
    %301 = vmatpush2.msra.mxu0 0.0
    %302 = vmatprep.mubr.f32.mxu0 0.0
    %303 = vmatmul.mubr.f32.gmra.mxu0 %v227
    %v304 = vpop.f32.mrf.mxu0
    %v305 = vadd.f32 %v208, %v304
    %v306 = vpop.f32.mrf.mxu0
    %307 = vmatprep.mubr.f32.mxu0 0.0
    %308 = vmatmul.mubr.f32.gmra.mxu0 %v230
    %v309 = vpop.f32.mrf.mxu0
    %v310 = vadd.f32 %v213, %v309
    %v311 = vpop.f32.mrf.mxu0
    %312 = vmatprep.mubr.f32.mxu0 0.0
    %313 = vmatmul.mubr.f32.gmra.mxu0 %v233
    %v314 = vpop.f32.mrf.mxu0
    %v315 = vadd.f32 %v218, %v314
    %v316 = vpop.f32.mrf.mxu0
    %317 = vmatprep.mubr.f32.mxu0 0.0
    %318 = vmatmul.mubr.f32.gmra.mxu0 %v236
    %v319 = vpop.f32.mrf.mxu0
    %v320 = vadd.f32 %v223, %v319
    %v321 = vpop.f32.mrf.mxu0
    %322 = vdwg.mxu0
    %v323 = vmax.f32 %v305, 0.0
    %v324 = vmax.f32 %v310, 0.0
    %v325 = vmax.f32 %v315, 0.0
    %v326 = vmax.f32 %v320, 0.0
    %v327 = vld [vmem:[%s5] sm:$0xff]
    %v328 = vld [vmem:[%s5 + $0x8] sm:$0xff]
    %v329 = vld [vmem:[%s6] sm:$0xff]
    %v330 = vld [vmem:[%s6 + $0x8] sm:$0xff]
    %332 = vset.pattern.permute.xlu0 0
    %333 = vperm.xlu0 %332, %v329
    %v334 = vpop.permute.xlu0 %333
    %337 = vset.pattern.permute.xlu0 0
    %338 = vperm.xlu0 %337, %v330
    %v339 = vpop.permute.xlu0 %338
    %v342 = vsel %vm65, %v327, 0
    %v345 = vsel %vm65, %v328, 0
    %347 = vmatprep.subr.mxu0 0.0
    %348 = vmatpush1.msra.mxu0 0.0
    %349 = vmatprep.subr.mxu0 0.0
    %350 = vmatpush1.msra.mxu0 0.0
    %351 = vmatprep.subr.mxu0 0.0
    %352 = vmatpush1.msra.mxu0 0.0
    %353 = vmatprep.subr.mxu0 0.0
    %354 = vmatpush1.msra.mxu0 0.0
    %355 = vmatprep.subr.mxu0 0.0
    %356 = vmatpush1.msra.mxu0 0.0
    %357 = vmatprep.subr.mxu0 0.0
    %358 = vmatpush1.msra.mxu0 0.0
    %359 = vmatprep.subr.mxu0 0.0
    %360 = vmatpush1.msra.mxu0 0.0
    %361 = vmatprep.subr.mxu0 0.0
    %362 = vmatpush1.msra.mxu0 0.0
    %363 = vmatprep.subr.mxu0 0.0
    %364 = vmatpush1.msra.mxu0 0.0
    %365 = vmatprep.subr.mxu0 0.0
    %366 = vmatpush1.msra.mxu0 0.0
    %367 = vmatprep.subr.mxu0 0.0
    %368 = vmatpush1.msra.mxu0 0.0
    %369 = vmatprep.subr.mxu0 0.0
    %370 = vmatpush1.msra.mxu0 0.0
    %371 = vmatprep.subr.mxu0 0.0
    %372 = vmatpush1.msra.mxu0 %v326
    %373 = vmatprep.subr.mxu0 0.0
    %374 = vmatpush1.msra.mxu0 %v325
    %375 = vmatprep.subr.mxu0 0.0
    %376 = vmatpush1.msra.mxu0 %v324
    %377 = vmatprep.subr.mxu0 0.0
    %378 = vmatpush1.msra.mxu0 %v323
    %379 = vmatprep.subr.mxu0 0.0
    %380 = vmatpush2.msra.mxu0 0.0
    %381 = vmatprep.subr.mxu0 0.0
    %382 = vmatpush2.msra.mxu0 0.0
    %383 = vmatprep.subr.mxu0 0.0
    %384 = vmatpush2.msra.mxu0 0.0
    %385 = vmatprep.subr.mxu0 0.0
    %386 = vmatpush2.msra.mxu0 0.0
    %387 = vmatprep.subr.mxu0 0.0
    %388 = vmatpush2.msra.mxu0 0.0
    %389 = vmatprep.subr.mxu0 0.0
    %390 = vmatpush2.msra.mxu0 0.0
    %391 = vmatprep.subr.mxu0 0.0
    %392 = vmatpush2.msra.mxu0 0.0
    %393 = vmatprep.subr.mxu0 0.0
    %394 = vmatpush2.msra.mxu0 0.0
    %395 = vmatprep.subr.mxu0 0.0
    %396 = vmatpush2.msra.mxu0 0.0
    %397 = vmatprep.subr.mxu0 0.0
    %398 = vmatpush2.msra.mxu0 0.0
    %399 = vmatprep.subr.mxu0 0.0
    %400 = vmatpush2.msra.mxu0 0.0
    %401 = vmatprep.subr.mxu0 0.0
    %402 = vmatpush2.msra.mxu0 0.0
    %403 = vmatprep.subr.mxu0 0.0
    %404 = vmatpush2.msra.mxu0 0.0
    %405 = vmatprep.subr.mxu0 0.0
    %406 = vmatpush2.msra.mxu0 0.0
    %407 = vmatprep.subr.mxu0 0.0
    %408 = vmatpush2.msra.mxu0 0.0
    %409 = vmatprep.subr.mxu0 0.0
    %410 = vmatpush2.msra.mxu0 0.0
    %411 = vmatprep.mubr.f32.mxu0 0.0
    %412 = vmatmul.mubr.f32.gmra.mxu0 %v342
    %v413 = vpop.f32.mrf.mxu0
    %v414 = vadd.f32 %v334, %v413
    %v415 = vpop.f32.mrf.mxu0
    %416 = vmatprep.mubr.f32.mxu0 0.0
    %417 = vmatmul.mubr.f32.gmra.mxu0 %v345
    %v418 = vpop.f32.mrf.mxu0
    %v419 = vadd.f32 %v339, %v418
    %v420 = vpop.f32.mrf.mxu0
    %421 = vdwg.mxu0
    %v422 = vmax.f32 %v414, 0.0
    %v423 = vmax.f32 %v419, 0.0
    %v424 = vld [vmem:[%s7] sm:$0xff]
    %v425 = vld [vmem:[%s7 + $0x8] sm:$0xff]
    %427 = vset.pattern.permute.xlu0 0
    %428 = vperm.xlu0 %427, %v424
    %v429 = vpop.permute.xlu0 %428
    %432 = vset.pattern.permute.xlu0 0
    %433 = vperm.xlu0 %432, %v425
    %v434 = vpop.permute.xlu0 %433
    %v436 = vmul.f32 %v429, %v422
    %v437 = vmul.f32 %v434, %v423
    %v438 = vadd.f32 %v436, %v437
    %v439 = vrot.slane %v438, 4
    %v440 = vadd.f32 %v438, %v439
    %v441 = vrot.slane %v440, 2
    %v442 = vadd.f32 %v440, %v441
    %v443 = vrot.slane %v442, 1
    %v444 = vadd.f32 %v442, %v443
    %v445 = vld [vmem:[#allocation2] sm:$0x1]
    %447 = vset.pattern.permute.xlu0 0
    %448 = vperm.xlu0 %447, %v445
    %v449 = vpop.permute.xlu0 %448
    %v451 = vlaneseq
    %v452 = vshrl.u32 %v451, 7
    %v453 = vsub.s32 0, %v452
    %v454 = vrot.slane %v449, %v453
    %v455 = vadd.f32 %v444, %v454
    %456 = vst [vmem:[#allocation3] sm:$0x1] %v455
    // Predicated region
    $region38: #{tpu_custom_call.1} parent=1 // pred_check
      _
    $region39: #{tpu_custom_call.1} parent=1 // pred_check_branch
      %458 = sbr.rel (0) target = $region41
    $region40: #{tpu_custom_call.1} parent=1 // pred_region
      %s460 = ssub.s32 16, 16
      %461 = vsyncadd [#allocation4], %s460
      %s463 = sshll.u32 [#allocation3], 4
      %s464 = int_to_ptr.vmem [resolvable:$true] %s463
      %466 = dma.vmem_to_hbm [thread:$0]  %s464, 16, %s9, [#allocation4]
    $region41: #{tpu_custom_call.1} parent=1 // pred_fallthru
      _
    // Predicated region
    $region42: #{tpu_custom_call.1} parent=1 // pred_check
      _
    $region43: #{tpu_custom_call.1} parent=1 // pred_check_branch
      %468 = sbr.rel (0) target = $region45
    $region44: #{tpu_custom_call.1} parent=1 // pred_region
      %469 = dma.done [#allocation4], 16
    $region45: #{tpu_custom_call.1} parent=1 // pred_fallthru
      _
    %470 = vsyncpa [#allocation4], 1

</llo_original>
